<compile_context>
chip_gen: v5e
topology: v5e:2x2
jax: 0.10.0
libtpu: 0.0.40
codegen_flags: <defaults>
</compile_context>

<pallas_src>
import functools

import jax
import jax.numpy as jnp
from jax.experimental import pallas as pl
from jax.experimental.pallas import tpu as pltpu


# ---------------------------------------------------------------------------
# Tile selection helpers (static Python on static shapes)
# ---------------------------------------------------------------------------
def _pick_tile(dim: int, target: int, align: int = 128) -> int:
    """Largest multiple of `align` that divides `dim` and is <= target.

    If `dim` fits under `target`, or is not `align`-aligned (so it cannot be tiled
    without padding), return `dim` itself (block dim == full array dim is always legal).
    """
    if dim <= target or dim % align != 0:
        return dim
    q = dim // align
    for m in range(min(q, max(target // align, 1)), 0, -1):
        if q % m == 0:
            return m * align
    return dim


def _vmem_limit_bytes() -> int:
    """Half of physical VMEM, clamped to [16, 64] MiB (64 on v5e/v6e, 32 on v7x)."""
    try:
        cap = int(getattr(pltpu.get_tpu_info(), "vmem_capacity_bytes", 128 << 20))
    except Exception:  # pragma: no cover - conservative fallback
        cap = 128 << 20
    return min(max(cap // 2, 16 << 20), 64 << 20)


# ---------------------------------------------------------------------------
# Kernel
# ---------------------------------------------------------------------------
def _matvec_kernel(x_ref, m_ref, out_ref):
    """out[1, TN] += x[1, TK] @ M[TK, TN]; out block is resident across the k axis."""
    @pl.when(pl.program_id(1) == 0)
    def _():
        out_ref[...] = jnp.zeros_like(out_ref)

    out_ref[...] += jnp.dot(
        x_ref[...], m_ref[...], preferred_element_type=jnp.float32
    )


# ---------------------------------------------------------------------------
# Wrapper
# ---------------------------------------------------------------------------
@functools.partial(jax.jit, static_argnames=("tk_target", "tn_target"))
def discriminator_forward(input_tensor, input_matrix, discriminator_bias,
                          *, tk_target: int = 2048, tn_target=None):
    """Pallas implementation of Discriminator.forward().

    Args:
      input_tensor:       (1, n) float32
      input_matrix:       (n, d) float32
      discriminator_bias: (1, n) float32
      tk_target:          max reduction-tile size along n.
      tn_target:          max output-lane tile size along d (None -> as big as VMEM allows).
    Returns:
      (output, bias_value): ((1, d), (1, n)) float32
    """
    one, n = input_tensor.shape
    n2, d = input_matrix.shape
    assert one == 1 and n2 == n and discriminator_bias.shape == (1, n)
    # TODO(synk): if many input vectors are evaluated, batch them into the M dimension so
    # one (n, d) matrix stream serves the whole batch (escapes the mem-bound M=1 regime).

    vmem_limit = _vmem_limit_bytes()
    tile_budget = max(vmem_limit // 3, 1 << 20)      # one matrix tile (double-buffered + out)

    # Reduction tile along n: 128-aligned divisor of n (or all of n when unaligned/small).
    tk = _pick_tile(n, tk_target)

    # Lane tile along d: prefer the full (HBM-contiguous) width if it fits the budget.
    if tn_target is None:
        tn_eff = max(128, min(d, tile_budget // max(tk * 4, 1)))
    else:
        tn_eff = tn_target
    tn = _pick_tile(d, tn_eff)

    # Keep >= 2 lane-tiles when d is large so the "parallel" axis can shard across the
    # two TensorCores on v7x (halves of >= 4 KiB stay DMA-friendly on v5e/v6e).
    if d // tn == 1 and d >= 2048 and (d // 2) % 128 == 0:
        tn = d // 2

    grid_j = d // tn   # output / lane tiles  (parallel)
    grid_k = n // tk   # reduction tiles      (arbitrary, last)

    # Make sure the scoped VMEM limit covers the chosen (possibly unaligned-full) tiles.
    need = 2 * tk * tn * 4 + 4 * tk * 4 + 2 * tn * 4 + (1 << 20)
    vmem_limit = int(max(vmem_limit, need))

    out = pl.pallas_call(
        _matvec_kernel,
        out_shape=jax.ShapeDtypeStruct((1, d), jnp.float32),
        grid=(grid_j, grid_k),
        in_specs=[
            pl.BlockSpec((1, tk), lambda j, k: (0, k)),    # x tile (tiny)
            pl.BlockSpec((tk, tn), lambda j, k: (k, j)),   # matrix tile (streamed, HBM-bound)
        ],
        out_specs=pl.BlockSpec((1, tn), lambda j, k: (0, j)),
        compiler_params=pltpu.CompilerParams(
            dimension_semantics=("parallel", "arbitrary"),
            vmem_limit_bytes=vmem_limit,
        ),
    )(input_tensor, input_matrix)

    # (1, n) elementwise multiply: launch-overhead dominated as a kernel, so do it inline.
    bias_value = input_tensor * discriminator_bias

    return out, bias_value


# ---------------------------------------------------------------------------
# Test
# ---------------------------------------------------------------------------
if __name__ == "__main__":
    def _check(n, d, seed, **tile_kwargs):
        key = jax.random.PRNGKey(seed)
        k1, k2, k3 = jax.random.split(key, 3)
        x = jax.random.normal(k1, (1, n), dtype=jnp.float32)
        m = jax.random.normal(k2, (n, d), dtype=jnp.float32)
        b = jax.random.normal(k3, (1, n), dtype=jnp.float32)

        out, bias_val = discriminator_forward(x, m, b, **tile_kwargs)
        jax.block_until_ready((out, bias_val))

        ref_out = x @ m
        ref_bias = (x[0] * b[0])[None, :]
        assert out.shape == (1, d) and bias_val.shape == (1, n)
        assert jnp.allclose(out, ref_out, atol=1e-4, rtol=1e-4), "matvec mismatch"
        assert jnp.allclose(bias_val, ref_bias, atol=1e-6), "bias mismatch"

    # Small shapes matching the module spec (n items, d latent dims); grid = (1, 1),
    # tiles are the full (unaligned) dims -> no padding anywhere.
    _check(n=8, d=32, seed=0)
    # Unaligned medium shapes: full-dim blocks, still no padding.
    _check(n=100, d=48, seed=1)
    # 128-aligned shapes forced onto a multi-tile grid (j=5, k=3) to exercise the
    # pipelined reduction / resident-output-accumulator path.
    _check(n=384, d=640, seed=0, tk_target=128, tn_target=128)

    print("KERNEL_OK")
</pallas_src>

<mosaic_0001>
module attributes {stable_mosaic.version = 11 : i64} {
  func.func @_matvec_kernel(%arg0: i32, %arg1: i32, %arg2: memref<1x8xf32, #tpu.memory_space<vmem>>, %arg3: memref<8x32xf32, #tpu.memory_space<vmem>>, %arg4: memref<1x32xf32, #tpu.memory_space<vmem>>) attributes {dimension_semantics = [#tpu.dimension_semantics<parallel>, #tpu.dimension_semantics<arbitrary>], iteration_bounds = array<i64: 1, 1>, scalar_prefetch = 0 : i64, scratch_operands = 0 : i64, tpu.core_type = #tpu.core_type<tc>, window_params = [{transform_indices = @transform_0, window_bounds = array<i64: 1, 8>}, {transform_indices = @transform_1, window_bounds = array<i64: 8, 32>}, {transform_indices = @transform_2, window_bounds = array<i64: 1, 32>}]} {
    %c0_i32 = arith.constant 0 : i32
    %0 = arith.cmpi eq, %arg1, %c0_i32 : i32
    %1 = arith.extui %0 : i1 to i32
    %c0_i32_0 = arith.constant 0 : i32
    %2 = arith.cmpi ne, %1, %c0_i32_0 : i32
    scf.if %2 {
      %cst_8 = arith.constant 0.000000e+00 : f32
      %9 = vector.broadcast %cst_8 : f32 to vector<1x32xf32>
      %c0_9 = arith.constant 0 : index
      %c0_10 = arith.constant 0 : index
      %10 = vector.load %arg4[%c0_9, %c0_10] : memref<1x32xf32, #tpu.memory_space<vmem>>, vector<1x32xf32>
      tpu.vector_store %arg4[%c0_9, %c0_10], %9 {strides = array<i32>} : memref<1x32xf32, #tpu.memory_space<vmem>>, vector<1x32xf32>,
    } else {
    }
    %c0 = arith.constant 0 : index
    %c0_1 = arith.constant 0 : index
    %3 = vector.load %arg4[%c0, %c0_1] : memref<1x32xf32, #tpu.memory_space<vmem>>, vector<1x32xf32>
    %c0_2 = arith.constant 0 : index
    %c0_3 = arith.constant 0 : index
    %4 = vector.load %arg2[%c0_2, %c0_3] : memref<1x8xf32, #tpu.memory_space<vmem>>, vector<1x8xf32>
    %c0_4 = arith.constant 0 : index
    %c0_5 = arith.constant 0 : index
    %5 = vector.load %arg3[%c0_4, %c0_5] : memref<8x32xf32, #tpu.memory_space<vmem>>, vector<8x32xf32>
    %cst = arith.constant dense<0.000000e+00> : vector<1x32xf32>
    %6 = tpu.matmul %4, %5, %cst {dimension_numbers = #tpu.dot_dimension_numbers<[1], [0], [0], [1], [0, 0, 1, 1], [], []>} : vector<1x8xf32>, vector<8x32xf32>, vector<1x32xf32> -> vector<1x32xf32>
    %7 = arith.addf %3, %6 : vector<1x32xf32>
    %c0_6 = arith.constant 0 : index
    %c0_7 = arith.constant 0 : index
    %8 = vector.load %arg4[%c0_6, %c0_7] : memref<1x32xf32, #tpu.memory_space<vmem>>, vector<1x32xf32>
    tpu.vector_store %arg4[%c0_6, %c0_7], %7 {strides = array<i32>} : memref<1x32xf32, #tpu.memory_space<vmem>>, vector<1x32xf32>,
    return
  }
  func.func @transform_0(%arg0: i32, %arg1: i32) -> (i32, i32) {
    %c0_i32 = arith.constant 0 : i32
    %c0_i32_0 = arith.constant 0 : i32
    return %c0_i32, %arg1 : i32, i32
  }
  func.func @transform_1(%arg0: i32, %arg1: i32) -> (i32, i32) {
    %c0_i32 = arith.constant 0 : i32
    return %arg1, %arg0 : i32, i32
  }
  func.func @transform_2(%arg0: i32, %arg1: i32) -> (i32, i32) {
    %c0_i32 = arith.constant 0 : i32
    %c0_i32_0 = arith.constant 0 : i32
    return %c0_i32, %arg0 : i32, i32
  }
}

</mosaic_0001>

<llo_original>
// kernel: mul.1
$region0: #{mul.1}
  #allocation2 [shape = 's32[1]{0}', space=sflag, size = 0x4, scoped, tag = 'scoped memory for mul.1']
  %s0 = inlined_call_operand.vmem [shape: f32[1,8], index: 0, kind: input, shape index: {}]
  %s1 = inlined_call_operand.vmem [shape: f32[1,8], index: 1, kind: input, shape index: {}]
  %s2 = inlined_call_operand.hbm [shape: f32[1,8], index: 2, kind: output, shape index: {}]
  $region1: #{mul.1} parent=0
    #allocation0 [shape = 'u8[512]{0}', space=vmem, size = 0x400, scoped, tag = 'operand span for operand 2']
    #allocation1 [shape = 's32[1]{0}', space=sflag, size = 0x4, scoped, tag = 'scoped memory for mul.1']
    %3 = vsyncpa [#allocation1], 0
    %v4 = vld [vmem:[%s0] sm:$0x1]
    %v5 = vld [vmem:[%s1] sm:$0x1]
    %6 = xla_tuple %v4, %v5
    %7 = xla_tuple %6
    %v8 = vmul.f32 %v4, %v5
    %9 = xla_tuple %v8
    %10 = vst [vmem:[#allocation0] sm:$0x1] %v8
    %12 = vsyncadd [#allocation1], 0
    %s14 = sshll.u32 [#allocation0], 4
    %s15 = int_to_ptr.vmem [resolvable:$true] %s14
    %s16 = sshll.u32 %s2, 4
    %s17 = int_to_ptr.hbm [resolvable:$true] %s16
    %19 = dma.vmem_to_hbm [thread:$0]  %s15, 16, %s17, [#allocation1]
    %21 = dma.done [#allocation1], 16
    %22 = vsyncpa [#allocation1], 1

// kernel: discriminator_forward.1
$region0: #{discriminator_forward.1}
  #allocation0 [shape = 'u32[]', space=smem, size = 0x4, offset = 0x4, fixed_abs, tag = 'smem constant byte address 0x4 - core index']
  #allocation1 [shape = 'u32[72,128]{1,0:T(1,128)}', space=vmem, size = 0x9000, scoped, tag = 'internal scratch']
  %s0 = inlined_call_operand.vmem [shape: f32[1,8], index: 0, kind: input, shape index: {}]
  %s1 = inlined_call_operand.hbm [shape: f32[8,32], index: 1, kind: input, shape index: {}]
  %s2 = inlined_call_operand.hbm [shape: f32[1,32], index: 2, kind: output, shape index: {}]
  %s3 = sld [smem:[#allocation0]]
  $region26: #{discriminator_forward.1} parent=0
    _
  %s5 = ssub.s32 1, %s3
  %s6 = scalar_select 0, %s5, %s3
  $region1: #{discriminator_forward.1} parent=0
    #allocation2 [shape = 'u8[4096]{0}', space=vmem, size = 0x1000, scoped, tag = 'input window, operand 1, single buffered']
    #allocation3 [shape = 's32[1]{0}', space=sflag, size = 0x4, scoped, tag = 'scoped memory for discriminator_forward.1']
    #allocation4 [shape = 's32[1]{0}', space=sflag, size = 0x4, scoped, tag = 'scoped memory for discriminator_forward.1']
    #allocation5 [shape = 'u8[512]{0}', space=vmem, size = 0x400, scoped, tag = 'output window, operand 0, single buffered']
    %7 = vsyncpa [#allocation3], 0
    %8 = vsyncpa [#allocation4], 0
    // Predicated region
    $region2: #{discriminator_forward.1} parent=1 // pred_check
      _
    $region3: #{discriminator_forward.1} parent=1 // pred_check_branch
      %10 = sbr.rel (0) target = $region5
    $region4: #{discriminator_forward.1} parent=1 // pred_region
      _
    $region5: #{discriminator_forward.1} parent=1 // pred_fallthru
      _
    // Predicated region
    $region6: #{discriminator_forward.1} parent=1 // pred_check
      _
    $region7: #{discriminator_forward.1} parent=1 // pred_check_branch
      %12 = sbr.rel (0) target = $region9
    $region8: #{discriminator_forward.1} parent=1 // pred_region
      %14 = vsyncadd [#allocation3], 0
      %s16 = sshll.u32 %s1, 4
      %s17 = int_to_ptr.hbm [resolvable:$true] %s16
      %s18 = sshll.u32 [#allocation2], 4
      %s19 = int_to_ptr.vmem [resolvable:$true] %s18
      %21 = dma.hbm_to_vmem [thread:$0]  %s17, 128, %s19, [#allocation3]
    $region9: #{discriminator_forward.1} parent=1 // pred_fallthru
      _
    // Predicated region
    $region10: #{discriminator_forward.1} parent=1 // pred_check
      _
    $region11: #{discriminator_forward.1} parent=1 // pred_check_branch
      %23 = sbr.rel (0) target = $region13
    $region12: #{discriminator_forward.1} parent=1 // pred_region
      %25 = dma.done [#allocation3], 128
    $region13: #{discriminator_forward.1} parent=1 // pred_fallthru
      _
    %p26 = scmp.eq.s32.totalorder 0, 0
    // Predicated region
    $region14: #{discriminator_forward.1} parent=1 // pred_check
      %p27 = pneg %p26
    $region15: #{discriminator_forward.1} parent=1 // pred_check_branch
      %29 = sbr.rel (%p27) target = $region17
    $region16: #{discriminator_forward.1} parent=1 // pred_region
      %vm30 = vcmask 253952
      %31 = vst.msk [vmem:[#allocation5] sm:$0x1] %vm30, 0.0
    $region17: #{discriminator_forward.1} parent=1 // pred_fallthru
      _
    %v32 = vld [vmem:[#allocation5] sm:$0x1]
    %v33 = vld [vmem:[%s0] sm:$0x1]
    %v34 = vld [vmem:[#allocation2] sm:$0xff]
    %vm35 = vcmask 64512
    %v37 = vsel %vm35, %v33, 0
    %39 = vmatpush.msra.mxu0 0.0
    %40 = vmatpush.msra.mxu0 0.0
    %41 = vmatpush.msra.mxu0 0.0
    %42 = vmatpush.msra.mxu0 0.0
    %43 = vmatpush.msra.mxu0 0.0
    %44 = vmatpush.msra.mxu0 0.0
    %45 = vmatpush.msra.mxu0 0.0
    %46 = vmatpush.msra.mxu0 0.0
    %47 = vmatpush.msra.mxu0 0.0
    %48 = vmatpush.msra.mxu0 0.0
    %49 = vmatpush.msra.mxu0 0.0
    %50 = vmatpush.msra.mxu0 0.0
    %51 = vmatpush.msra.mxu0 0.0
    %52 = vmatpush.msra.mxu0 0.0
    %53 = vmatpush.msra.mxu0 0.0
    %54 = vmatpush.msra.mxu0 %v34
    %55 = vmatmul.f32.gmra.mxu0 %v37
    %v56 = vpop.f32.mrf.mxu0
    %v57 = vadd.f32 0.0, %v56
    %58 = vdwg.mxu0
    %v59 = vadd.f32 %v32, %v57
    %vm60 = vcmask 253952
    %61 = vst.msk [vmem:[#allocation5] sm:$0x1] %vm60, %v59
    // Predicated region
    $region18: #{discriminator_forward.1} parent=1 // pred_check
      _
    $region19: #{discriminator_forward.1} parent=1 // pred_check_branch
      %63 = sbr.rel (0) target = $region21
    $region20: #{discriminator_forward.1} parent=1 // pred_region
      %65 = vsyncadd [#allocation4], 0
      %s67 = sshll.u32 [#allocation5], 4
      %s68 = int_to_ptr.vmem [resolvable:$true] %s67
      %s69 = sshll.u32 %s2, 4
      %s70 = int_to_ptr.hbm [resolvable:$true] %s69
      %72 = dma.vmem_to_hbm [thread:$0]  %s68, 16, %s70, [#allocation4]
    $region21: #{discriminator_forward.1} parent=1 // pred_fallthru
      _
    // Predicated region
    $region22: #{discriminator_forward.1} parent=1 // pred_check
      _
    $region23: #{discriminator_forward.1} parent=1 // pred_check_branch
      %74 = sbr.rel (0) target = $region25
    $region24: #{discriminator_forward.1} parent=1 // pred_region
      %76 = dma.done [#allocation4], 16
    $region25: #{discriminator_forward.1} parent=1 // pred_fallthru
      _
    %77 = vsyncpa [#allocation3], 1
    %78 = vsyncpa [#allocation4], 1

</llo_original>
